<compile_context>
chip_gen: v6e
topology: v6e:2x2x1
jax: 0.10.0
libtpu: 0.0.40
codegen_flags: <defaults>
</compile_context>

<pallas_src>
import jax
import jax.numpy as jnp
from jax.experimental import pallas as pl
from jax.experimental.pallas import tpu as pltpu


def merge_layer_kernel(x1_ref, x2_ref, w1a_ref, w1b_ref, b1_ref, w2_ref, b2_ref, o_ref):
    # fc1 as two MXU pushes into one f32 accumulator (no concatenate).
    h = jnp.dot(x1_ref[...], w1a_ref[...], preferred_element_type=jnp.float32)
    h = h + jnp.dot(x2_ref[...], w1b_ref[...], preferred_element_type=jnp.float32)
    # bias + ReLU on the VPU -- free filler under the MXU; keep it in-kernel.
    h = jnp.maximum(h + b1_ref[...], 0.0)
    # fc2
    out = jnp.dot(h.astype(w2_ref.dtype), w2_ref[...],
                  preferred_element_type=jnp.float32) + b2_ref[...]
    o_ref[...] = out.astype(o_ref.dtype)


def _round_up(x, m):
    return ((x + m - 1) // m) * m


def merge_layer(x1, x2, w1, b1, w2, b2, *, block_b=None, use_bf16=False):
    """MergeLayer forward: fc2(relu(fc1(concat([x1, x2], -1)))).

    x1: [B, d1], x2: [B, d2]
    w1: [d3, d1+d2], b1: [d3]   (PyTorch nn.Linear layout: weight = [out, in])
    w2: [d4, d3],    b2: [d4]
    returns [B, d4]
    """
    B, d1 = x1.shape
    d2 = x2.shape[1]
    d3 = w1.shape[0]
    d4 = w2.shape[0]
    out_dtype = x1.dtype

    LANE = 128
    d3p = _round_up(d3, LANE)   # lane-dense hidden: full-width MXU N, unmasked stores
    d4p = _round_up(d4, LANE)   # lane-dense output: unmasked vst + dense HBM writeback

    w_dtype = jnp.bfloat16 if use_bf16 else w1.dtype
    x_dtype = jnp.bfloat16 if use_bf16 else x1.dtype

    # Pre-transpose to [in, out], split fc1 by input block, zero-pad widths.
    # Zero padding is exact: padded fc1 columns give relu(0 + 0) = 0, padded fc2
    # rows are zero, padded output columns are sliced off below.
    w1_t = w1.T.astype(w_dtype)                                      # [d1+d2, d3]
    w1a = jnp.zeros((d1, d3p), w_dtype).at[:, :d3].set(w1_t[:d1])
    w1b = jnp.zeros((d2, d3p), w_dtype).at[:, :d3].set(w1_t[d1:])
    b1p = jnp.zeros((1, d3p), jnp.float32).at[0, :d3].set(b1.astype(jnp.float32))
    w2p = jnp.zeros((d3p, d4p), w_dtype).at[:d3, :d4].set(w2.T.astype(w_dtype))
    b2p = jnp.zeros((1, d4p), jnp.float32).at[0, :d4].set(b2.astype(jnp.float32))

    x1c = x1.astype(x_dtype)
    x2c = x2.astype(x_dtype)

    # Batch tile: keep double-buffered in/out tiles + the f32 hidden tile inside
    # a conservative ~24 MiB budget (fits v7x's 64 MiB VMEM / default scoped
    # limit with room for the resident weights).
    if block_b is None:
        budget = 24 * 1024 * 1024
        bytes_per_row = 4 * (2 * (d1 + d2 + d4p) + d3p)
        block_b = min(1024, max(8, budget // max(1, bytes_per_row)))
    block_b = min(block_b, B)
    if B >= 8:
        block_b = max(8, (block_b // 8) * 8)     # sublane-aligned batch tile

    # Pad batch so the grid tiles evenly; padded rows are sliced off below.
    Bp = pl.cdiv(B, block_b) * block_b
    if Bp != B:
        x1c = jnp.pad(x1c, ((0, Bp - B), (0, 0)))
        x2c = jnp.pad(x2c, ((0, Bp - B), (0, 0)))

    grid = (Bp // block_b,)

    flops = 2 * Bp * ((d1 + d2) * d3p + d3p * d4p)
    bytes_accessed = (
        x1c.size * x1c.dtype.itemsize + x2c.size * x2c.dtype.itemsize
        + w1a.size * w1a.dtype.itemsize + w1b.size * w1b.dtype.itemsize
        + w2p.size * w2p.dtype.itemsize
        + (b1p.size + b2p.size) * 4
        + Bp * d4p * jnp.dtype(out_dtype).itemsize
    )

    out = pl.pallas_call(
        merge_layer_kernel,
        out_shape=jax.ShapeDtypeStruct((Bp, d4p), out_dtype),
        grid_spec=pltpu.PrefetchScalarGridSpec(
            num_scalar_prefetch=0,
            grid=grid,
            in_specs=[
                pl.BlockSpec((block_b, d1), lambda i: (i, 0)),   # x1 tile (pipelined)
                pl.BlockSpec((block_b, d2), lambda i: (i, 0)),   # x2 tile (pipelined)
                pl.BlockSpec((d1, d3p), lambda i: (0, 0)),       # w1[:d1] (VMEM-resident)
                pl.BlockSpec((d2, d3p), lambda i: (0, 0)),       # w1[d1:] (VMEM-resident)
                pl.BlockSpec((1, d3p), lambda i: (0, 0)),        # b1      (VMEM-resident)
                pl.BlockSpec((d3p, d4p), lambda i: (0, 0)),      # w2      (VMEM-resident)
                pl.BlockSpec((1, d4p), lambda i: (0, 0)),        # b2      (VMEM-resident)
            ],
            out_specs=pl.BlockSpec((block_b, d4p), lambda i: (i, 0)),
        ),
        compiler_params=pltpu.CompilerParams(
            dimension_semantics=("parallel",),   # batch grid shards across v7x's 2 TCs
        ),
        cost_estimate=pl.CostEstimate(
            flops=flops, transcendentals=0, bytes_accessed=bytes_accessed),
    )(x1c, x2c, w1a, w1b, b1p, w2p, b2p)

    return out[:B, :d4]


def init_params(key, dim1, dim2, dim3, dim4, dtype=jnp.float32):
    """Mirror the PyTorch module's init: xavier_normal weights ([out, in]),
    nn.Linear-default uniform biases."""
    k1, k2, k3, k4 = jax.random.split(key, 4)
    fan_in1, fan_out1 = dim1 + dim2, dim3
    fan_in2, fan_out2 = dim3, dim4
    std1 = (2.0 / (fan_in1 + fan_out1)) ** 0.5
    std2 = (2.0 / (fan_in2 + fan_out2)) ** 0.5
    w1 = std1 * jax.random.normal(k1, (dim3, dim1 + dim2), dtype)
    w2 = std2 * jax.random.normal(k2, (dim4, dim3), dtype)
    b1 = jax.random.uniform(k3, (dim3,), dtype, -1.0 / fan_in1 ** 0.5, 1.0 / fan_in1 ** 0.5)
    b2 = jax.random.uniform(k4, (dim4,), dtype, -1.0 / fan_in2 ** 0.5, 1.0 / fan_in2 ** 0.5)
    return w1, b1, w2, b2


def reference(x1, x2, w1, b1, w2, b2):
    x = jnp.concatenate([x1, x2], axis=1)
    h = jnp.maximum(x @ w1.T + b1, 0.0)
    return h @ w2.T + b2


if __name__ == "__main__":
    # LSTMPool instantiates MergeLayer(feat_dim, feat_dim, feat_dim, feat_dim).
    feat_dim = 32
    dim1 = dim2 = dim3 = dim4 = feat_dim
    B = 8

    key = jax.random.PRNGKey(0)
    kx1, kx2, kp = jax.random.split(key, 3)
    x1 = jax.random.normal(kx1, (B, dim1), jnp.float32)
    x2 = jax.random.normal(kx2, (B, dim2), jnp.float32)
    w1, b1, w2, b2 = init_params(kp, dim1, dim2, dim3, dim4)

    out = merge_layer(x1, x2, w1, b1, w2, b2)   # f32 path: exact parity with reference
    out = jax.block_until_ready(out)

    ref = reference(x1, x2, w1, b1, w2, b2)
    assert out.shape == (B, dim4)
    assert jnp.allclose(out, ref, atol=1e-5, rtol=1e-5), "mismatch vs pure-JAX reference"
    print("KERNEL_OK")
</pallas_src>

<mosaic_0001>
module attributes {stable_mosaic.version = 11 : i64} {
  func.func @merge_layer_kernel(%arg0: i32, %arg1: memref<8x32xf32, #tpu.memory_space<vmem>>, %arg2: memref<8x32xf32, #tpu.memory_space<vmem>>, %arg3: memref<32x128xf32, #tpu.memory_space<vmem>>, %arg4: memref<32x128xf32, #tpu.memory_space<vmem>>, %arg5: memref<1x128xf32, #tpu.memory_space<vmem>>, %arg6: memref<128x128xf32, #tpu.memory_space<vmem>>, %arg7: memref<1x128xf32, #tpu.memory_space<vmem>>, %arg8: memref<8x128xf32, #tpu.memory_space<vmem>>) attributes {dimension_semantics = [#tpu.dimension_semantics<parallel>], iteration_bounds = array<i64: 1>, scalar_prefetch = 0 : i64, scratch_operands = 0 : i64, tpu.core_type = #tpu.core_type<tc>, window_params = [{transform_indices = @transform_0, window_bounds = array<i64: 8, 32>}, {transform_indices = @transform_1, window_bounds = array<i64: 8, 32>}, {pipeline_mode = #tpu.pipeline_mode<synchronous>, transform_indices = @transform_2, window_bounds = array<i64: 32, 128>}, {pipeline_mode = #tpu.pipeline_mode<synchronous>, transform_indices = @transform_3, window_bounds = array<i64: 32, 128>}, {pipeline_mode = #tpu.pipeline_mode<synchronous>, transform_indices = @transform_4, window_bounds = array<i64: 1, 128>}, {pipeline_mode = #tpu.pipeline_mode<synchronous>, transform_indices = @transform_5, window_bounds = array<i64: 128, 128>}, {pipeline_mode = #tpu.pipeline_mode<synchronous>, transform_indices = @transform_6, window_bounds = array<i64: 1, 128>}, {transform_indices = @transform_7, window_bounds = array<i64: 8, 128>}]} {
    %c0 = arith.constant 0 : index
    %c0_0 = arith.constant 0 : index
    %0 = vector.load %arg1[%c0, %c0_0] : memref<8x32xf32, #tpu.memory_space<vmem>>, vector<8x32xf32>
    %c0_1 = arith.constant 0 : index
    %c0_2 = arith.constant 0 : index
    %1 = vector.load %arg3[%c0_1, %c0_2] : memref<32x128xf32, #tpu.memory_space<vmem>>, vector<32x128xf32>
    %cst = arith.constant dense<0.000000e+00> : vector<8x128xf32>
    %2 = tpu.matmul %0, %1, %cst {dimension_numbers = #tpu.dot_dimension_numbers<[1], [0], [0], [1], [0, 0, 1, 1], [], []>} : vector<8x32xf32>, vector<32x128xf32>, vector<8x128xf32> -> vector<8x128xf32>
    %c0_3 = arith.constant 0 : index
    %c0_4 = arith.constant 0 : index
    %3 = vector.load %arg2[%c0_3, %c0_4] : memref<8x32xf32, #tpu.memory_space<vmem>>, vector<8x32xf32>
    %c0_5 = arith.constant 0 : index
    %c0_6 = arith.constant 0 : index
    %4 = vector.load %arg4[%c0_5, %c0_6] : memref<32x128xf32, #tpu.memory_space<vmem>>, vector<32x128xf32>
    %cst_7 = arith.constant dense<0.000000e+00> : vector<8x128xf32>
    %5 = tpu.matmul %3, %4, %cst_7 {dimension_numbers = #tpu.dot_dimension_numbers<[1], [0], [0], [1], [0, 0, 1, 1], [], []>} : vector<8x32xf32>, vector<32x128xf32>, vector<8x128xf32> -> vector<8x128xf32>
    %6 = arith.addf %2, %5 : vector<8x128xf32>
    %c0_8 = arith.constant 0 : index
    %c0_9 = arith.constant 0 : index
    %7 = vector.load %arg5[%c0_8, %c0_9] : memref<1x128xf32, #tpu.memory_space<vmem>>, vector<1x128xf32>
    %8 = vector.broadcast %7 : vector<1x128xf32> to vector<8x128xf32>
    %9 = arith.addf %6, %8 : vector<8x128xf32>
    %cst_10 = arith.constant 0.000000e+00 : f32
    %10 = vector.broadcast %cst_10 : f32 to vector<8x128xf32>
    %11 = arith.maximumf %9, %10 : vector<8x128xf32>
    %c0_11 = arith.constant 0 : index
    %c0_12 = arith.constant 0 : index
    %12 = vector.load %arg6[%c0_11, %c0_12] : memref<128x128xf32, #tpu.memory_space<vmem>>, vector<128x128xf32>
    %cst_13 = arith.constant dense<0.000000e+00> : vector<8x128xf32>
    %13 = tpu.matmul %11, %12, %cst_13 {dimension_numbers = #tpu.dot_dimension_numbers<[1], [0], [0], [1], [0, 0, 1, 1], [], []>} : vector<8x128xf32>, vector<128x128xf32>, vector<8x128xf32> -> vector<8x128xf32>
    %c0_14 = arith.constant 0 : index
    %c0_15 = arith.constant 0 : index
    %14 = vector.load %arg7[%c0_14, %c0_15] : memref<1x128xf32, #tpu.memory_space<vmem>>, vector<1x128xf32>
    %15 = vector.broadcast %14 : vector<1x128xf32> to vector<8x128xf32>
    %16 = arith.addf %13, %15 : vector<8x128xf32>
    %c0_16 = arith.constant 0 : index
    %c0_17 = arith.constant 0 : index
    %17 = vector.load %arg8[%c0_16, %c0_17] : memref<8x128xf32, #tpu.memory_space<vmem>>, vector<8x128xf32>
    tpu.vector_store %arg8[%c0_16, %c0_17], %16 {strides = array<i32>} : memref<8x128xf32, #tpu.memory_space<vmem>>, vector<8x128xf32>,
    return
  }
  func.func @transform_0(%arg0: i32) -> (i32, i32) {
    %c0_i32 = arith.constant 0 : i32
    %c0_i32_0 = arith.constant 0 : i32
    return %arg0, %c0_i32 : i32, i32
  }
  func.func @transform_1(%arg0: i32) -> (i32, i32) {
    %c0_i32 = arith.constant 0 : i32
    %c0_i32_0 = arith.constant 0 : i32
    return %arg0, %c0_i32 : i32, i32
  }
  func.func @transform_2(%arg0: i32) -> (i32, i32) {
    %c0_i32 = arith.constant 0 : i32
    %c0_i32_0 = arith.constant 0 : i32
    %c0_i32_1 = arith.constant 0 : i32
    return %c0_i32, %c0_i32_0 : i32, i32
  }
  func.func @transform_3(%arg0: i32) -> (i32, i32) {
    %c0_i32 = arith.constant 0 : i32
    %c0_i32_0 = arith.constant 0 : i32
    %c0_i32_1 = arith.constant 0 : i32
    return %c0_i32, %c0_i32_0 : i32, i32
  }
  func.func @transform_4(%arg0: i32) -> (i32, i32) {
    %c0_i32 = arith.constant 0 : i32
    %c0_i32_0 = arith.constant 0 : i32
    %c0_i32_1 = arith.constant 0 : i32
    return %c0_i32, %c0_i32_0 : i32, i32
  }
  func.func @transform_5(%arg0: i32) -> (i32, i32) {
    %c0_i32 = arith.constant 0 : i32
    %c0_i32_0 = arith.constant 0 : i32
    %c0_i32_1 = arith.constant 0 : i32
    return %c0_i32, %c0_i32_0 : i32, i32
  }
  func.func @transform_6(%arg0: i32) -> (i32, i32) {
    %c0_i32 = arith.constant 0 : i32
    %c0_i32_0 = arith.constant 0 : i32
    %c0_i32_1 = arith.constant 0 : i32
    return %c0_i32, %c0_i32_0 : i32, i32
  }
  func.func @transform_7(%arg0: i32) -> (i32, i32) {
    %c0_i32 = arith.constant 0 : i32
    %c0_i32_0 = arith.constant 0 : i32
    return %arg0, %c0_i32 : i32, i32
  }
}

</mosaic_0001>

<llo_original>
// kernel: tpu_custom_call.1
$region0: #{tpu_custom_call.1}
  #allocation0 [shape = 'u32[]', space=smem, size = 0x4, offset = 0x4, fixed_abs, tag = 'smem constant byte address 0x4 - core index']
  #allocation1 [shape = 'u32[144,128]{1,0:T(1,128)}', space=vmem, size = 0x12000, scoped, tag = 'internal scratch']
  %s0 = inlined_call_operand.hbm [shape: f32[8,32], index: 0, kind: input, shape index: {}]
  %s1 = inlined_call_operand.hbm [shape: f32[8,32], index: 1, kind: input, shape index: {}]
  %s2 = inlined_call_operand.hbm [shape: f32[32,128], index: 2, kind: input, shape index: {}]
  %s3 = inlined_call_operand.hbm [shape: f32[32,128], index: 3, kind: input, shape index: {}]
  %s4 = inlined_call_operand.vmem [shape: f32[1,128], index: 4, kind: input, shape index: {}]
  %s5 = inlined_call_operand.hbm [shape: f32[128,128], index: 5, kind: input, shape index: {}]
  %s6 = inlined_call_operand.vmem [shape: f32[1,128], index: 6, kind: input, shape index: {}]
  %s7 = inlined_call_operand.hbm [shape: f32[8,128], index: 7, kind: output, shape index: {}]
  %s8 = sld [smem:[#allocation0]]
  $region58: #{tpu_custom_call.1} parent=0
    _
  %s10 = ssub.s32 1, %s8
  %s11 = scalar_select 0, %s10, %s8
  $region1: #{tpu_custom_call.1} parent=0
    #allocation2 [shape = 'u8[4096]{0}', space=vmem, size = 0x1000, scoped, tag = 'input window, operand 0, single buffered']
    #allocation3 [shape = 's32[1]{0}', space=sflag, size = 0x4, scoped, tag = 'scoped memory for tpu_custom_call.1']
    #allocation4 [shape = 's32[1]{0}', space=sflag, size = 0x4, scoped, tag = 'scoped memory for tpu_custom_call.1']
    #allocation5 [shape = 'u8[4096]{0}', space=vmem, size = 0x1000, scoped, tag = 'input window, operand 1, single buffered']
    #allocation6 [shape = 's32[1]{0}', space=sflag, size = 0x4, scoped, tag = 'scoped memory for tpu_custom_call.1']
    #allocation7 [shape = 'u8[16384]{0}', space=vmem, size = 0x4000, scoped, tag = 'input window, operand 2, single buffered']
    #allocation8 [shape = 'u8[16384]{0}', space=vmem, size = 0x4000, scoped, tag = 'input window, operand 3, single buffered']
    #allocation9 [shape = 's32[1]{0}', space=sflag, size = 0x4, scoped, tag = 'scoped memory for tpu_custom_call.1']
    #allocation10 [shape = 'u8[65536]{0}', space=vmem, size = 0x10000, scoped, tag = 'input window, operand 5, single buffered']
    #allocation11 [shape = 'u8[4096]{0}', space=vmem, size = 0x1000, scoped, tag = 'output window, operand 0, single buffered']
    %12 = vsyncpa [#allocation3], 0
    %13 = vsyncpa [#allocation6], 0
    %14 = vsyncpa [#allocation9], 0
    %15 = vsyncpa [#allocation4], 0
    // Predicated region
    $region2: #{tpu_custom_call.1} parent=1 // pred_check
      _
    $region3: #{tpu_custom_call.1} parent=1 // pred_check_branch
      %17 = sbr.rel (0) target = $region5
    $region4: #{tpu_custom_call.1} parent=1 // pred_region
      %s19 = ssub.s32 128, 128
      %20 = vsyncadd [#allocation3], %s19
      %s22 = sshll.u32 [#allocation2], 4
      %s23 = int_to_ptr.vmem [resolvable:$true] %s22
      %25 = dma.hbm_to_vmem [thread:$0]  %s0, 128, %s23, [#allocation3]
    $region5: #{tpu_custom_call.1} parent=1 // pred_fallthru
      _
    // Predicated region
    $region6: #{tpu_custom_call.1} parent=1 // pred_check
      _
    $region7: #{tpu_custom_call.1} parent=1 // pred_check_branch
      %27 = sbr.rel (0) target = $region9
    $region8: #{tpu_custom_call.1} parent=1 // pred_region
      %s29 = ssub.s32 128, 128
      %30 = vsyncadd [#allocation6], %s29
      %s32 = sshll.u32 [#allocation5], 4
      %s33 = int_to_ptr.vmem [resolvable:$true] %s32
      %35 = dma.hbm_to_vmem [thread:$0]  %s1, 128, %s33, [#allocation6]
    $region9: #{tpu_custom_call.1} parent=1 // pred_fallthru
      _
    // Predicated region
    $region10: #{tpu_custom_call.1} parent=1 // pred_check
      _
    $region11: #{tpu_custom_call.1} parent=1 // pred_check_branch
      %37 = sbr.rel (0) target = $region13
    $region12: #{tpu_custom_call.1} parent=1 // pred_region
      %s39 = ssub.s32 512, 512
      %40 = vsyncadd [#allocation6], %s39
      %s41 = sshll.u32 [#allocation7], 4
      %s42 = int_to_ptr.vmem [resolvable:$true] %s41
      %47 = dma.hbm_to_vmem [thread:$0]  %s2, 512, %s42, [#allocation6], 128, 128, 8
    $region13: #{tpu_custom_call.1} parent=1 // pred_fallthru
      _
    // Predicated region
    $region14: #{tpu_custom_call.1} parent=1 // pred_check
      _
    $region15: #{tpu_custom_call.1} parent=1 // pred_check_branch
      %49 = sbr.rel (0) target = $region17
    $region16: #{tpu_custom_call.1} parent=1 // pred_region
      %s51 = ssub.s32 512, 512
      %52 = vsyncadd [#allocation9], %s51
      %s53 = sshll.u32 [#allocation8], 4
      %s54 = int_to_ptr.vmem [resolvable:$true] %s53
      %59 = dma.hbm_to_vmem [thread:$0]  %s3, 512, %s54, [#allocation9], 128, 128, 8
    $region17: #{tpu_custom_call.1} parent=1 // pred_fallthru
      _
    // Predicated region
    $region18: #{tpu_custom_call.1} parent=1 // pred_check
      _
    $region19: #{tpu_custom_call.1} parent=1 // pred_check_branch
      %61 = sbr.rel (0) target = $region21
    $region20: #{tpu_custom_call.1} parent=1 // pred_region
      _
    $region21: #{tpu_custom_call.1} parent=1 // pred_fallthru
      _
    // Predicated region
    $region22: #{tpu_custom_call.1} parent=1 // pred_check
      _
    $region23: #{tpu_custom_call.1} parent=1 // pred_check_branch
      %63 = sbr.rel (0) target = $region25
    $region24: #{tpu_custom_call.1} parent=1 // pred_region
      %s65 = ssub.s32 2048, 2048
      %66 = vsyncadd [#allocation9], %s65
      %s67 = sshll.u32 [#allocation10], 4
      %s68 = int_to_ptr.vmem [resolvable:$true] %s67
      %73 = dma.hbm_to_vmem [thread:$0]  %s5, 2048, %s68, [#allocation9], 128, 128, 8
    $region25: #{tpu_custom_call.1} parent=1 // pred_fallthru
      _
    // Predicated region
    $region26: #{tpu_custom_call.1} parent=1 // pred_check
      _
    $region27: #{tpu_custom_call.1} parent=1 // pred_check_branch
      %75 = sbr.rel (0) target = $region29
    $region28: #{tpu_custom_call.1} parent=1 // pred_region
      _
    $region29: #{tpu_custom_call.1} parent=1 // pred_fallthru
      _
    // Predicated region
    $region30: #{tpu_custom_call.1} parent=1 // pred_check
      _
    $region31: #{tpu_custom_call.1} parent=1 // pred_check_branch
      %77 = sbr.rel (0) target = $region33
    $region32: #{tpu_custom_call.1} parent=1 // pred_region
      %78 = dma.done [#allocation3], 128
    $region33: #{tpu_custom_call.1} parent=1 // pred_fallthru
      _
    // Predicated region
    $region34: #{tpu_custom_call.1} parent=1 // pred_check
      _
    $region35: #{tpu_custom_call.1} parent=1 // pred_check_branch
      %80 = sbr.rel (0) target = $region37
    $region36: #{tpu_custom_call.1} parent=1 // pred_region
      %81 = dma.done [#allocation6], 128
    $region37: #{tpu_custom_call.1} parent=1 // pred_fallthru
      _
    // Predicated region
    $region38: #{tpu_custom_call.1} parent=1 // pred_check
      _
    $region39: #{tpu_custom_call.1} parent=1 // pred_check_branch
      %83 = sbr.rel (0) target = $region41
    $region40: #{tpu_custom_call.1} parent=1 // pred_region
      %84 = dma.done [#allocation6], 512
    $region41: #{tpu_custom_call.1} parent=1 // pred_fallthru
      _
    // Predicated region
    $region42: #{tpu_custom_call.1} parent=1 // pred_check
      _
    $region43: #{tpu_custom_call.1} parent=1 // pred_check_branch
      %86 = sbr.rel (0) target = $region45
    $region44: #{tpu_custom_call.1} parent=1 // pred_region
      %87 = dma.done [#allocation9], 512
    $region45: #{tpu_custom_call.1} parent=1 // pred_fallthru
      _
    // Predicated region
    $region46: #{tpu_custom_call.1} parent=1 // pred_check
      _
    $region47: #{tpu_custom_call.1} parent=1 // pred_check_branch
      %89 = sbr.rel (0) target = $region49
    $region48: #{tpu_custom_call.1} parent=1 // pred_region
      %90 = dma.done [#allocation9], 2048
    $region49: #{tpu_custom_call.1} parent=1 // pred_fallthru
      _
    %v91 = vld [vmem:[#allocation2] sm:$0xff]
    %v92 = vld [vmem:[#allocation7] sm:$0xff]
    %v93 = vld [vmem:[#allocation7 + $0x8] sm:$0xff]
    %v94 = vld [vmem:[#allocation7 + $0x10] sm:$0xff]
    %v95 = vld [vmem:[#allocation7 + $0x18] sm:$0xff]
    %v96 = vld [vmem:[#allocation5] sm:$0xff]
    %v97 = vld [vmem:[#allocation8] sm:$0xff]
    %v98 = vld [vmem:[#allocation8 + $0x8] sm:$0xff]
    %v99 = vld [vmem:[#allocation8 + $0x10] sm:$0xff]
    %v100 = vld [vmem:[#allocation8 + $0x18] sm:$0xff]
    %vm101 = vcmask 261120
    %v103 = vsel %vm101, %v96, 0
    %105 = vmatprep.subr.mxu0 0.0
    %106 = vmatpush1.msra.mxu0 0.0
    %107 = vmatprep.subr.mxu0 0.0
    %108 = vmatpush1.msra.mxu0 0.0
    %109 = vmatprep.subr.mxu0 0.0
    %110 = vmatpush1.msra.mxu0 0.0
    %111 = vmatprep.subr.mxu0 0.0
    %112 = vmatpush1.msra.mxu0 0.0
    %113 = vmatprep.subr.mxu0 0.0
    %114 = vmatpush1.msra.mxu0 0.0
    %115 = vmatprep.subr.mxu0 0.0
    %116 = vmatpush1.msra.mxu0 0.0
    %117 = vmatprep.subr.mxu0 0.0
    %118 = vmatpush1.msra.mxu0 0.0
    %119 = vmatprep.subr.mxu0 0.0
    %120 = vmatpush1.msra.mxu0 0.0
    %121 = vmatprep.subr.mxu0 0.0
    %122 = vmatpush1.msra.mxu0 0.0
    %123 = vmatprep.subr.mxu0 0.0
    %124 = vmatpush1.msra.mxu0 0.0
    %125 = vmatprep.subr.mxu0 0.0
    %126 = vmatpush1.msra.mxu0 0.0
    %127 = vmatprep.subr.mxu0 0.0
    %128 = vmatpush1.msra.mxu0 0.0
    %129 = vmatprep.subr.mxu0 0.0
    %130 = vmatpush1.msra.mxu0 %v100
    %131 = vmatprep.subr.mxu0 0.0
    %132 = vmatpush1.msra.mxu0 %v99
    %133 = vmatprep.subr.mxu0 0.0
    %134 = vmatpush1.msra.mxu0 %v98
    %135 = vmatprep.subr.mxu0 0.0
    %136 = vmatpush1.msra.mxu0 %v97
    %137 = vmatprep.subr.mxu0 0.0
    %138 = vmatpush2.msra.mxu0 0.0
    %139 = vmatprep.subr.mxu0 0.0
    %140 = vmatpush2.msra.mxu0 0.0
    %141 = vmatprep.subr.mxu0 0.0
    %142 = vmatpush2.msra.mxu0 0.0
    %143 = vmatprep.subr.mxu0 0.0
    %144 = vmatpush2.msra.mxu0 0.0
    %145 = vmatprep.subr.mxu0 0.0
    %146 = vmatpush2.msra.mxu0 0.0
    %147 = vmatprep.subr.mxu0 0.0
    %148 = vmatpush2.msra.mxu0 0.0
    %149 = vmatprep.subr.mxu0 0.0
    %150 = vmatpush2.msra.mxu0 0.0
    %151 = vmatprep.subr.mxu0 0.0
    %152 = vmatpush2.msra.mxu0 0.0
    %153 = vmatprep.subr.mxu0 0.0
    %154 = vmatpush2.msra.mxu0 0.0
    %155 = vmatprep.subr.mxu0 0.0
    %156 = vmatpush2.msra.mxu0 0.0
    %157 = vmatprep.subr.mxu0 0.0
    %158 = vmatpush2.msra.mxu0 0.0
    %159 = vmatprep.subr.mxu0 0.0
    %160 = vmatpush2.msra.mxu0 0.0
    %161 = vmatprep.subr.mxu0 0.0
    %162 = vmatpush2.msra.mxu0 0.0
    %163 = vmatprep.subr.mxu0 0.0
    %164 = vmatpush2.msra.mxu0 0.0
    %165 = vmatprep.subr.mxu0 0.0
    %166 = vmatpush2.msra.mxu0 0.0
    %167 = vmatprep.subr.mxu0 0.0
    %168 = vmatpush2.msra.mxu0 0.0
    %169 = vmatprep.mubr.f32.mxu0 0.0
    %170 = vmatmul.mubr.f32.gmra.mxu0 %v103
    %v171 = vpop.f32.mrf.mxu0
    %v172 = vadd.f32 0.0, %v171
    %v173 = vpop.f32.mrf.mxu0
    %174 = vdwg.mxu0
    %v176 = vsel %vm101, %v91, 0
    %178 = vmatprep.subr.mxu0 0.0
    %179 = vmatpush1.msra.mxu0 0.0
    %180 = vmatprep.subr.mxu0 0.0
    %181 = vmatpush1.msra.mxu0 0.0
    %182 = vmatprep.subr.mxu0 0.0
    %183 = vmatpush1.msra.mxu0 0.0
    %184 = vmatprep.subr.mxu0 0.0
    %185 = vmatpush1.msra.mxu0 0.0
    %186 = vmatprep.subr.mxu0 0.0
    %187 = vmatpush1.msra.mxu0 0.0
    %188 = vmatprep.subr.mxu0 0.0
    %189 = vmatpush1.msra.mxu0 0.0
    %190 = vmatprep.subr.mxu0 0.0
    %191 = vmatpush1.msra.mxu0 0.0
    %192 = vmatprep.subr.mxu0 0.0
    %193 = vmatpush1.msra.mxu0 0.0
    %194 = vmatprep.subr.mxu0 0.0
    %195 = vmatpush1.msra.mxu0 0.0
    %196 = vmatprep.subr.mxu0 0.0
    %197 = vmatpush1.msra.mxu0 0.0
    %198 = vmatprep.subr.mxu0 0.0
    %199 = vmatpush1.msra.mxu0 0.0
    %200 = vmatprep.subr.mxu0 0.0
    %201 = vmatpush1.msra.mxu0 0.0
    %202 = vmatprep.subr.mxu0 0.0
    %203 = vmatpush1.msra.mxu0 %v95
    %204 = vmatprep.subr.mxu0 0.0
    %205 = vmatpush1.msra.mxu0 %v94
    %206 = vmatprep.subr.mxu0 0.0
    %207 = vmatpush1.msra.mxu0 %v93
    %208 = vmatprep.subr.mxu0 0.0
    %209 = vmatpush1.msra.mxu0 %v92
    %210 = vmatprep.subr.mxu0 0.0
    %211 = vmatpush2.msra.mxu0 0.0
    %212 = vmatprep.subr.mxu0 0.0
    %213 = vmatpush2.msra.mxu0 0.0
    %214 = vmatprep.subr.mxu0 0.0
    %215 = vmatpush2.msra.mxu0 0.0
    %216 = vmatprep.subr.mxu0 0.0
    %217 = vmatpush2.msra.mxu0 0.0
    %218 = vmatprep.subr.mxu0 0.0
    %219 = vmatpush2.msra.mxu0 0.0
    %220 = vmatprep.subr.mxu0 0.0
    %221 = vmatpush2.msra.mxu0 0.0
    %222 = vmatprep.subr.mxu0 0.0
    %223 = vmatpush2.msra.mxu0 0.0
    %224 = vmatprep.subr.mxu0 0.0
    %225 = vmatpush2.msra.mxu0 0.0
    %226 = vmatprep.subr.mxu0 0.0
    %227 = vmatpush2.msra.mxu0 0.0
    %228 = vmatprep.subr.mxu0 0.0
    %229 = vmatpush2.msra.mxu0 0.0
    %230 = vmatprep.subr.mxu0 0.0
    %231 = vmatpush2.msra.mxu0 0.0
    %232 = vmatprep.subr.mxu0 0.0
    %233 = vmatpush2.msra.mxu0 0.0
    %234 = vmatprep.subr.mxu0 0.0
    %235 = vmatpush2.msra.mxu0 0.0
    %236 = vmatprep.subr.mxu0 0.0
    %237 = vmatpush2.msra.mxu0 0.0
    %238 = vmatprep.subr.mxu0 0.0
    %239 = vmatpush2.msra.mxu0 0.0
    %240 = vmatprep.subr.mxu0 0.0
    %241 = vmatpush2.msra.mxu0 0.0
    %242 = vmatprep.mubr.f32.mxu0 0.0
    %243 = vmatmul.mubr.f32.gmra.mxu0 %v176
    %v244 = vpop.f32.mrf.mxu0
    %v245 = vadd.f32 %v172, %v244
    %v246 = vpop.f32.mrf.mxu0
    %247 = vdwg.mxu0
    %v248 = vld [vmem:[%s4] sm:$0x1]
    %v250 = vlaneseq
    %v251 = vshrl.u32 %v250, 7
    %v252 = vsub.s32 0, %v251
    %v253 = vrot.slane %v248, %v252
    %v255 = vadd.f32 %v245, %v253
    %v256 = vmax.f32 %v255, 0.0
    %v257 = vld [vmem:[#allocation10] sm:$0xff]
    %v258 = vld [vmem:[#allocation10 + $0x8] sm:$0xff]
    %v259 = vld [vmem:[#allocation10 + $0x10] sm:$0xff]
    %v260 = vld [vmem:[#allocation10 + $0x18] sm:$0xff]
    %v261 = vld [vmem:[#allocation10 + $0x20] sm:$0xff]
    %v262 = vld [vmem:[#allocation10 + $0x28] sm:$0xff]
    %v263 = vld [vmem:[#allocation10 + $0x30] sm:$0xff]
    %v264 = vld [vmem:[#allocation10 + $0x38] sm:$0xff]
    %v265 = vld [vmem:[#allocation10 + $0x40] sm:$0xff]
    %v266 = vld [vmem:[#allocation10 + $0x48] sm:$0xff]
    %v267 = vld [vmem:[#allocation10 + $0x50] sm:$0xff]
    %v268 = vld [vmem:[#allocation10 + $0x58] sm:$0xff]
    %v269 = vld [vmem:[#allocation10 + $0x60] sm:$0xff]
    %v270 = vld [vmem:[#allocation10 + $0x68] sm:$0xff]
    %v271 = vld [vmem:[#allocation10 + $0x70] sm:$0xff]
    %v272 = vld [vmem:[#allocation10 + $0x78] sm:$0xff]
    %v273 = vld [vmem:[%s6] sm:$0x1]
    %v275 = vlaneseq
    %v276 = vshrl.u32 %v275, 7
    %v277 = vsub.s32 0, %v276
    %v278 = vrot.slane %v273, %v277
    %280 = vmatprep.subr.mxu0 0.0
    %281 = vmatpush1.msra.mxu0 %v272
    %282 = vmatprep.subr.mxu0 0.0
    %283 = vmatpush1.msra.mxu0 %v271
    %284 = vmatprep.subr.mxu0 0.0
    %285 = vmatpush1.msra.mxu0 %v270
    %286 = vmatprep.subr.mxu0 0.0
    %287 = vmatpush1.msra.mxu0 %v269
    %288 = vmatprep.subr.mxu0 0.0
    %289 = vmatpush1.msra.mxu0 %v268
    %290 = vmatprep.subr.mxu0 0.0
    %291 = vmatpush1.msra.mxu0 %v267
    %292 = vmatprep.subr.mxu0 0.0
    %293 = vmatpush1.msra.mxu0 %v266
    %294 = vmatprep.subr.mxu0 0.0
    %295 = vmatpush1.msra.mxu0 %v265
    %296 = vmatprep.subr.mxu0 0.0
    %297 = vmatpush1.msra.mxu0 %v264
    %298 = vmatprep.subr.mxu0 0.0
    %299 = vmatpush1.msra.mxu0 %v263
    %300 = vmatprep.subr.mxu0 0.0
    %301 = vmatpush1.msra.mxu0 %v262
    %302 = vmatprep.subr.mxu0 0.0
    %303 = vmatpush1.msra.mxu0 %v261
    %304 = vmatprep.subr.mxu0 0.0
    %305 = vmatpush1.msra.mxu0 %v260
    %306 = vmatprep.subr.mxu0 0.0
    %307 = vmatpush1.msra.mxu0 %v259
    %308 = vmatprep.subr.mxu0 0.0
    %309 = vmatpush1.msra.mxu0 %v258
    %310 = vmatprep.subr.mxu0 0.0
    %311 = vmatpush1.msra.mxu0 %v257
    %312 = vmatprep.subr.mxu0 0.0
    %313 = vmatpush2.msra.mxu0 0.0
    %314 = vmatprep.subr.mxu0 0.0
    %315 = vmatpush2.msra.mxu0 0.0
    %316 = vmatprep.subr.mxu0 0.0
    %317 = vmatpush2.msra.mxu0 0.0
    %318 = vmatprep.subr.mxu0 0.0
    %319 = vmatpush2.msra.mxu0 0.0
    %320 = vmatprep.subr.mxu0 0.0
    %321 = vmatpush2.msra.mxu0 0.0
    %322 = vmatprep.subr.mxu0 0.0
    %323 = vmatpush2.msra.mxu0 0.0
    %324 = vmatprep.subr.mxu0 0.0
    %325 = vmatpush2.msra.mxu0 0.0
    %326 = vmatprep.subr.mxu0 0.0
    %327 = vmatpush2.msra.mxu0 0.0
    %328 = vmatprep.subr.mxu0 0.0
    %329 = vmatpush2.msra.mxu0 0.0
    %330 = vmatprep.subr.mxu0 0.0
    %331 = vmatpush2.msra.mxu0 0.0
    %332 = vmatprep.subr.mxu0 0.0
    %333 = vmatpush2.msra.mxu0 0.0
    %334 = vmatprep.subr.mxu0 0.0
    %335 = vmatpush2.msra.mxu0 0.0
    %336 = vmatprep.subr.mxu0 0.0
    %337 = vmatpush2.msra.mxu0 0.0
    %338 = vmatprep.subr.mxu0 0.0
    %339 = vmatpush2.msra.mxu0 0.0
    %340 = vmatprep.subr.mxu0 0.0
    %341 = vmatpush2.msra.mxu0 0.0
    %342 = vmatprep.subr.mxu0 0.0
    %343 = vmatpush2.msra.mxu0 0.0
    %344 = vmatprep.mubr.f32.mxu0 0.0
    %345 = vmatmul.mubr.f32.gmra.mxu0 %v256
    %v346 = vpop.f32.mrf.mxu0
    %v347 = vadd.f32 %v278, %v346
    %v348 = vpop.f32.mrf.mxu0
    %349 = vdwg.mxu0
    %350 = vst [vmem:[#allocation11] sm:$0xff] %v347
    // Predicated region
    $region50: #{tpu_custom_call.1} parent=1 // pred_check
      _
    $region51: #{tpu_custom_call.1} parent=1 // pred_check_branch
      %352 = sbr.rel (0) target = $region53
    $region52: #{tpu_custom_call.1} parent=1 // pred_region
      %s354 = ssub.s32 128, 128
      %355 = vsyncadd [#allocation4], %s354
      %s357 = sshll.u32 [#allocation11], 4
      %s358 = int_to_ptr.vmem [resolvable:$true] %s357
      %360 = dma.vmem_to_hbm [thread:$0]  %s358, 128, %s7, [#allocation4]
    $region53: #{tpu_custom_call.1} parent=1 // pred_fallthru
      _
    // Predicated region
    $region54: #{tpu_custom_call.1} parent=1 // pred_check
      _
    $region55: #{tpu_custom_call.1} parent=1 // pred_check_branch
      %362 = sbr.rel (0) target = $region57
    $region56: #{tpu_custom_call.1} parent=1 // pred_region
      %363 = dma.done [#allocation4], 128
    $region57: #{tpu_custom_call.1} parent=1 // pred_fallthru
      _
    %364 = vsyncpa [#allocation3], 1
    %365 = vsyncpa [#allocation6], 1
    %366 = vsyncpa [#allocation9], 1
    %367 = vsyncpa [#allocation4], 1

</llo_original>
